<compile_context>
chip_gen: v5e
topology: v5e:2x2
jax: 0.10.0
libtpu: 0.0.40
codegen_flags: <defaults>
</compile_context>

<pallas_src>
import functools

import jax
import jax.numpy as jnp
from jax import lax
from jax.experimental import pallas as pl
from jax.experimental.pallas import tpu as pltpu


def _round_up(x, m):
    return ((x + m - 1) // m) * m


def _codebook_kernel(z_ref, e_ref, e_sq_ref, zq_ref, idx_ref, sse_ref,
                     min_sc, idx_sc, zq_sc, *, n_actual, dist_dtype,
                     gather_dtype):
    # z_ref    : (TN, D)    tile of flattened latents (model dtype)
    # e_ref    : (TK, D)    codebook tile (zero-padded rows beyond K)
    # e_sq_ref : (1, TK)    precomputed ||e||^2 (padded rows = +1e30), f32
    # zq_ref   : (TN, D)    quantized output tile (model dtype)
    # idx_ref  : (TN, 1)    int32 code indices
    # sse_ref  : (1, 1, D)  per-N-tile partial sum of squared error, f32
    # min_sc   : (TN, 1)    running min distance   (VMEM scratch, f32)
    # idx_sc   : (TN, 1)    running argmin         (VMEM scratch, int32)
    # zq_sc    : (TN, D)    running best code rows (VMEM scratch, f32)
    i = pl.program_id(0)
    kb = pl.program_id(1)
    nk = pl.num_programs(1)

    z = z_ref[...]                                        # (TN, D)
    e = e_ref[...]                                        # (TK, D)
    e_sq = e_sq_ref[...]                                  # (1, TK) f32
    tn = z.shape[0]
    tk = e.shape[0]

    # Cross term on the MXU: bf16 operands (native fast path), f32 accumulate.
    cross = lax.dot_general(z.astype(dist_dtype), e.astype(dist_dtype),
                            (((1,), (1,)), ((), ())),
                            preferred_element_type=jnp.float32)   # (TN, TK)
    # ||z||^2 is constant per latent row -> omitted from the argmin distance.
    d = e_sq - 2.0 * cross                                         # (TN, TK)

    # Local (this K tile) argmin; first occurrence wins on ties.
    local_min = jnp.min(d, axis=1, keepdims=True)                  # (TN, 1)
    big = jnp.int32(jnp.iinfo(jnp.int32).max)
    iota = lax.broadcasted_iota(jnp.int32, (tn, tk), 1) + kb * tk  # global ids
    local_idx = jnp.min(jnp.where(d == local_min, iota, big),
                        axis=1, keepdims=True)                     # (TN, 1)

    # Gather this tile's candidate code rows via a one-hot MXU matmul.
    one_hot = (iota == local_idx).astype(gather_dtype)             # (TN, TK)
    cand = lax.dot_general(one_hot, e.astype(gather_dtype),
                           (((1,), (0,)), ((), ())),
                           preferred_element_type=jnp.float32)     # (TN, D)

    @pl.when(kb == 0)
    def _init():
        min_sc[...] = local_min
        idx_sc[...] = local_idx
        zq_sc[...] = cand

    @pl.when(kb > 0)
    def _update():
        better = local_min < min_sc[...]                           # (TN, 1)
        min_sc[...] = jnp.where(better, local_min, min_sc[...])
        idx_sc[...] = jnp.where(better, local_idx, idx_sc[...])
        zq_sc[...] = jnp.where(better, cand, zq_sc[...])

    @pl.when(kb == nk - 1)
    def _finalize():
        z_q = zq_sc[...]                                           # (TN, D) f32
        zq_ref[...] = z_q.astype(zq_ref.dtype)
        idx_ref[...] = idx_sc[...]
        # SSE partial; rows of a ragged final N tile are masked out.
        row_ids = i * tn + lax.broadcasted_iota(jnp.int32, (tn, 1), 0)
        valid = row_ids < n_actual
        diff = z_q - z.astype(jnp.float32)
        sq = jnp.where(valid, diff * diff, 0.0)
        sse_ref[0] = jnp.sum(sq, axis=0, keepdims=True)            # (1, D)


def codebook_forward(z, embedding, beta=0.25, *, tile_n=512, tile_k=512,
                     dist_dtype=jnp.bfloat16):
    """Pallas implementation of Codebook.forward.

    z         : (B, S, D) latents
    embedding : (K, D)    codebook weights
    Returns (z_q, min_encoding_indices, loss) matching the PyTorch forward
    values (straight-through => z_q values ARE the quantized codes;
    loss = (1 + beta) * mean((z_q - z)^2)).
    """
    orig_shape = z.shape
    orig_dtype = z.dtype
    k, d = embedding.shape
    z_flat = z.reshape(-1, d)          # free (contiguous); no dtype cast pass
    n = z_flat.shape[0]

    # z_q / gather run in the model dtype (bf16 models keep the bf16 MXU path).
    gather_dtype = jnp.bfloat16 if orig_dtype == jnp.bfloat16 else jnp.float32

    # Tile sizes: sublane (second-to-last) dims must be multiples of 8;
    # K tiles kept 128-aligned so iota / one-hot work on full lanes.
    tile_n = max(8, min(_round_up(tile_n, 8), _round_up(n, 8)))
    tile_k = max(128, min(_round_up(tile_k, 128), _round_up(k, 128)))
    grid_n = pl.cdiv(n, tile_n)
    k_pad = _round_up(k, tile_k)
    grid_k = k_pad // tile_k

    # Only the small, load-once codebook is padded; z / z_q stay unpadded.
    e_p = jnp.pad(embedding, ((0, k_pad - k), (0, 0)))
    e_sq = jnp.sum(embedding.astype(jnp.float32) ** 2, axis=1)[None, :]
    e_sq = jnp.pad(e_sq, ((0, 0), (0, k_pad - k)), constant_values=1e30)

    kernel = functools.partial(_codebook_kernel, n_actual=n,
                               dist_dtype=dist_dtype, gather_dtype=gather_dtype)

    # Scoped-VMEM sizing (never below 32 MiB so v5e's 16 MiB default cannot
    # force tiny tiles; capped at v7x's 64 MiB physical VMEM).
    zsize = jnp.dtype(orig_dtype).itemsize
    wsize = jnp.dtype(embedding.dtype).itemsize
    vmem_est = (2 * tile_n * d * zsize            # z blocks (double-buffered)
                + 2 * tile_k * d * wsize          # codebook blocks
                + 2 * tile_k * 4                  # ||e||^2 blocks
                + 2 * tile_n * d * zsize          # z_q out blocks
                + 2 * tile_n * 4 + 2 * d * 4      # idx / sse out blocks
                + tile_n * (d + 2) * 4            # scratch
                + 8 * tile_n * tile_k * 4)        # in-flight (TN, TK) temps
    vmem_limit = int(min(max(vmem_est, 32 * 1024 * 1024), 64 * 1024 * 1024))

    z_q, idx, sse_part = pl.pallas_call(
        kernel,
        out_shape=(
            jax.ShapeDtypeStruct((n, d), orig_dtype),             # z_q
            jax.ShapeDtypeStruct((n, 1), jnp.int32),              # indices
            jax.ShapeDtypeStruct((grid_n, 1, d), jnp.float32),    # SSE partials
        ),
        grid_spec=pltpu.PrefetchScalarGridSpec(
            num_scalar_prefetch=0,
            grid=(grid_n, grid_k),
            in_specs=[
                pl.BlockSpec((tile_n, d), lambda i, kb: (i, 0)),    # z tile
                pl.BlockSpec((tile_k, d), lambda i, kb: (kb, 0)),   # codebook
                pl.BlockSpec((1, tile_k), lambda i, kb: (0, kb)),   # ||e||^2
            ],
            out_specs=[
                pl.BlockSpec((tile_n, d), lambda i, kb: (i, 0)),    # z_q
                pl.BlockSpec((tile_n, 1), lambda i, kb: (i, 0)),    # indices
                pl.BlockSpec((1, 1, d), lambda i, kb: (i, 0, 0)),   # SSE
            ],
            scratch_shapes=[
                pltpu.VMEM((tile_n, 1), jnp.float32),   # running min distance
                pltpu.VMEM((tile_n, 1), jnp.int32),     # running argmin
                pltpu.VMEM((tile_n, d), jnp.float32),   # running best rows
            ],
        ),
        compiler_params=pltpu.CompilerParams(
            dimension_semantics=("parallel", "arbitrary"),
            vmem_limit_bytes=vmem_limit,
        ),
    )(z_flat, e_p, e_sq)

    # forward values: mean((zq.detach()-z)^2) + beta*mean((zq-z.detach())^2)
    #               = (1 + beta) * mean((zq - z)^2)
    sse = jnp.sum(sse_part)
    loss = (1.0 + beta) * sse / jnp.float32(n * d)
    z_q = z_q.reshape(orig_shape)               # straight-through forward value
    min_encoding_indices = idx.reshape(-1)
    return z_q, min_encoding_indices, loss


def codebook_forward_ref(z, embedding, beta=0.25):
    """Pure-JAX reference (strict f32 distances) for correctness checking."""
    d_dim = embedding.shape[1]
    z_flat = z.reshape(-1, d_dim).astype(jnp.float32)
    e = embedding.astype(jnp.float32)
    d = (jnp.sum(z_flat ** 2, axis=1, keepdims=True)
         + jnp.sum(e ** 2, axis=1)[None, :]
         - 2.0 * z_flat @ e.T)
    idx = jnp.argmin(d, axis=1)
    z_q = e[idx].reshape(z.shape).astype(z.dtype)
    loss = (1.0 + beta) * jnp.mean((e[idx] - z_flat) ** 2)
    return z_q, idx.astype(jnp.int32), loss


if __name__ == "__main__":
    # Small shapes consistent with a VQ-GCN codebook: z is (batch, nodes, latent_dim).
    batch, seq, latent_dim = 2, 8, 32
    num_codes = 64
    beta = 0.25

    key = jax.random.PRNGKey(0)
    kz, ke = jax.random.split(key)
    z = jax.random.normal(kz, (batch, seq, latent_dim), dtype=jnp.float32)
    # nn.Embedding weight init: uniform(-1/K, 1/K), deterministic here.
    embedding = jax.random.uniform(
        ke, (num_codes, latent_dim), dtype=jnp.float32,
        minval=-1.0 / num_codes, maxval=1.0 / num_codes)

    # Default fast path: bf16 distance matmul on the MXU.
    z_q, idx, loss = codebook_forward(z, embedding, beta)
    jax.block_until_ready((z_q, idx, loss))

    z_q_r, idx_r, loss_r = codebook_forward_ref(z, embedding, beta)

    # f32-distance path: exact parity with the strict reference.
    z_q32, idx32, loss32 = codebook_forward(z, embedding, beta,
                                            dist_dtype=jnp.float32)
    assert jnp.array_equal(idx32, idx_r)
    assert jnp.allclose(z_q32, z_q_r, atol=1e-5, rtol=1e-5)
    assert jnp.allclose(loss32, loss_r, atol=1e-5, rtol=1e-5)

    # bf16 path: chosen code must be optimal up to bf16 rounding of the cross
    # term, and z_q / loss must be consistent with the chosen codes.
    z_flat = z.reshape(-1, latent_dim)
    d_exact = jnp.sum((z_flat[:, None, :] - embedding[None, :, :]) ** 2, axis=-1)
    tol = 2.0 ** -6 * jnp.max(jnp.abs(z_flat) @ jnp.abs(embedding).T) + 1e-6
    picked = jnp.take_along_axis(d_exact, idx[:, None], axis=1)[:, 0]
    assert jnp.all(picked <= jnp.min(d_exact, axis=1) + tol)
    assert jnp.allclose(z_q.reshape(-1, latent_dim), embedding[idx],
                        atol=1e-5, rtol=1e-5)
    loss_from_idx = (1.0 + beta) * jnp.mean((embedding[idx] - z_flat) ** 2)
    assert jnp.allclose(loss, loss_from_idx, rtol=1e-4, atol=1e-6)
    assert jnp.allclose(loss, loss_r, rtol=1e-2, atol=1e-4)

    print("KERNEL_OK")
</pallas_src>

<mosaic_0001>
module attributes {stable_mosaic.version = 11 : i64} {
  func.func @_codebook_kernel(%arg0: i32, %arg1: i32, %arg2: memref<16x32xf32, #tpu.memory_space<vmem>>, %arg3: memref<128x32xf32, #tpu.memory_space<vmem>>, %arg4: memref<1x128xf32, #tpu.memory_space<vmem>>, %arg5: memref<16x32xf32, #tpu.memory_space<vmem>>, %arg6: memref<16x1xi32, #tpu.memory_space<vmem>>, %arg7: memref<1x1x32xf32, #tpu.memory_space<vmem>>, %arg8: memref<16x1xf32, #tpu.memory_space<vmem>>, %arg9: memref<16x1xi32, #tpu.memory_space<vmem>>, %arg10: memref<16x32xf32, #tpu.memory_space<vmem>>) attributes {dimension_semantics = [#tpu.dimension_semantics<parallel>, #tpu.dimension_semantics<arbitrary>], iteration_bounds = array<i64: 1, 1>, scalar_prefetch = 0 : i64, scratch_operands = 3 : i64, tpu.core_type = #tpu.core_type<tc>, window_params = [{transform_indices = @transform_0, window_bounds = array<i64: 16, 32>}, {transform_indices = @transform_1, window_bounds = array<i64: 128, 32>}, {transform_indices = @transform_2, window_bounds = array<i64: 1, 128>}, {transform_indices = @transform_3, window_bounds = array<i64: 16, 32>}, {transform_indices = @transform_4, window_bounds = array<i64: 16, 1>}, {transform_indices = @transform_5, window_bounds = array<i64: 1, 1, 32>}]} {
    %c0 = arith.constant 0 : index
    %c0_0 = arith.constant 0 : index
    %0 = vector.load %arg2[%c0, %c0_0] : memref<16x32xf32, #tpu.memory_space<vmem>>, vector<16x32xf32>
    %c0_1 = arith.constant 0 : index
    %c0_2 = arith.constant 0 : index
    %1 = vector.load %arg3[%c0_1, %c0_2] : memref<128x32xf32, #tpu.memory_space<vmem>>, vector<128x32xf32>
    %c0_3 = arith.constant 0 : index
    %c0_4 = arith.constant 0 : index
    %2 = vector.load %arg4[%c0_3, %c0_4] : memref<1x128xf32, #tpu.memory_space<vmem>>, vector<1x128xf32>
    %3 = arith.truncf %0 : vector<16x32xf32> to vector<16x32xbf16>
    %4 = arith.truncf %1 : vector<128x32xf32> to vector<128x32xbf16>
    %cst = arith.constant dense<0.000000e+00> : vector<16x128xf32>
    %5 = tpu.matmul %3, %4, %cst {dimension_numbers = #tpu.dot_dimension_numbers<[1], [1], [0], [0], [0, 0, 1, 0], [], []>} : vector<16x32xbf16>, vector<128x32xbf16>, vector<16x128xf32> -> vector<16x128xf32>
    %cst_5 = arith.constant 2.000000e+00 : f32
    %6 = vector.broadcast %cst_5 : f32 to vector<16x128xf32>
    %7 = arith.mulf %6, %5 : vector<16x128xf32>
    %8 = vector.broadcast %2 : vector<1x128xf32> to vector<16x128xf32>
    %9 = arith.subf %8, %7 : vector<16x128xf32>
    %cst_6 = arith.constant dense<0x7F800000> : vector<16xf32>
    %10 = vector.multi_reduction <minimumf>, %9, %cst_6 [1] : vector<16x128xf32> to vector<16xf32>
    %11 = vector.shape_cast %10 : vector<16xf32> to vector<16x1xf32>
    %12 = tpu.iota {dimensions = array<i32: 1>} : vector<16x128xi32>
    %c128_i32 = arith.constant 128 : i32
    %13 = arith.muli %arg1, %c128_i32 : i32
    %14 = vector.broadcast %13 : i32 to vector<16x128xi32>
    %15 = arith.addi %12, %14 : vector<16x128xi32>
    %16 = vector.broadcast %11 : vector<16x1xf32> to vector<16x128xf32>
    %17 = arith.cmpf oeq, %9, %16 : vector<16x128xf32>
    %c2147483647_i32 = arith.constant 2147483647 : i32
    %18 = vector.broadcast %c2147483647_i32 : i32 to vector<16x128xi32>
    %19 = arith.select %17, %15, %18 : vector<16x128xi1>, vector<16x128xi32>
    %cst_7 = arith.constant dense<2147483647> : vector<16xi32>
    %20 = vector.multi_reduction <minsi>, %19, %cst_7 [1] : vector<16x128xi32> to vector<16xi32>
    %21 = vector.shape_cast %20 : vector<16xi32> to vector<16x1xi32>
    %22 = vector.broadcast %21 : vector<16x1xi32> to vector<16x128xi32>
    %23 = arith.cmpi eq, %15, %22 : vector<16x128xi32>
    %24 = arith.extui %23 : vector<16x128xi1> to vector<16x128xi32>
    %25 = arith.sitofp %24 : vector<16x128xi32> to vector<16x128xf32>
    %cst_8 = arith.constant dense<0.000000e+00> : vector<16x32xf32>
    %26 = tpu.matmul %25, %1, %cst_8 {dimension_numbers = #tpu.dot_dimension_numbers<[1], [0], [0], [1], [0, 0, 1, 1], [], []>} : vector<16x128xf32>, vector<128x32xf32>, vector<16x32xf32> -> vector<16x32xf32>
    %c0_i32 = arith.constant 0 : i32
    %27 = arith.cmpi eq, %arg1, %c0_i32 : i32
    %28 = arith.extui %27 : i1 to i32
    %c0_i32_9 = arith.constant 0 : i32
    %29 = arith.cmpi ne, %28, %c0_i32_9 : i32
    scf.if %29 {
      %c0_14 = arith.constant 0 : index
      %c0_15 = arith.constant 0 : index
      %36 = vector.load %arg8[%c0_14, %c0_15] : memref<16x1xf32, #tpu.memory_space<vmem>>, vector<16x1xf32>
      tpu.vector_store %arg8[%c0_14, %c0_15], %11 {strides = array<i32>} : memref<16x1xf32, #tpu.memory_space<vmem>>, vector<16x1xf32>,
      %c0_16 = arith.constant 0 : index
      %c0_17 = arith.constant 0 : index
      %37 = vector.load %arg9[%c0_16, %c0_17] : memref<16x1xi32, #tpu.memory_space<vmem>>, vector<16x1xi32>
      tpu.vector_store %arg9[%c0_16, %c0_17], %21 {strides = array<i32>} : memref<16x1xi32, #tpu.memory_space<vmem>>, vector<16x1xi32>,
      %c0_18 = arith.constant 0 : index
      %c0_19 = arith.constant 0 : index
      %38 = vector.load %arg10[%c0_18, %c0_19] : memref<16x32xf32, #tpu.memory_space<vmem>>, vector<16x32xf32>
      tpu.vector_store %arg10[%c0_18, %c0_19], %26 {strides = array<i32>} : memref<16x32xf32, #tpu.memory_space<vmem>>, vector<16x32xf32>,
    } else {
    }
    %c0_i32_10 = arith.constant 0 : i32
    %30 = arith.cmpi sgt, %arg1, %c0_i32_10 : i32
    %31 = arith.extui %30 : i1 to i32
    %c0_i32_11 = arith.constant 0 : i32
    %32 = arith.cmpi ne, %31, %c0_i32_11 : i32
    scf.if %32 {
      %c0_14 = arith.constant 0 : index
      %c0_15 = arith.constant 0 : index
      %36 = vector.load %arg8[%c0_14, %c0_15] : memref<16x1xf32, #tpu.memory_space<vmem>>, vector<16x1xf32>
      %37 = arith.cmpf olt, %11, %36 : vector<16x1xf32>
      %c0_16 = arith.constant 0 : index
      %c0_17 = arith.constant 0 : index
      %38 = vector.load %arg8[%c0_16, %c0_17] : memref<16x1xf32, #tpu.memory_space<vmem>>, vector<16x1xf32>
      %39 = arith.select %37, %11, %38 : vector<16x1xi1>, vector<16x1xf32>
      %c0_18 = arith.constant 0 : index
      %c0_19 = arith.constant 0 : index
      %40 = vector.load %arg8[%c0_18, %c0_19] : memref<16x1xf32, #tpu.memory_space<vmem>>, vector<16x1xf32>
      tpu.vector_store %arg8[%c0_18, %c0_19], %39 {strides = array<i32>} : memref<16x1xf32, #tpu.memory_space<vmem>>, vector<16x1xf32>,
      %c0_20 = arith.constant 0 : index
      %c0_21 = arith.constant 0 : index
      %41 = vector.load %arg9[%c0_20, %c0_21] : memref<16x1xi32, #tpu.memory_space<vmem>>, vector<16x1xi32>
      %42 = arith.select %37, %21, %41 : vector<16x1xi1>, vector<16x1xi32>
      %c0_22 = arith.constant 0 : index
      %c0_23 = arith.constant 0 : index
      %43 = vector.load %arg9[%c0_22, %c0_23] : memref<16x1xi32, #tpu.memory_space<vmem>>, vector<16x1xi32>
      tpu.vector_store %arg9[%c0_22, %c0_23], %42 {strides = array<i32>} : memref<16x1xi32, #tpu.memory_space<vmem>>, vector<16x1xi32>,
      %c0_24 = arith.constant 0 : index
      %c0_25 = arith.constant 0 : index
      %44 = vector.load %arg10[%c0_24, %c0_25] : memref<16x32xf32, #tpu.memory_space<vmem>>, vector<16x32xf32>
      %45 = vector.shape_cast %37 : vector<16x1xi1> to vector<16x1xi1>
      %46 = vector.broadcast %45 : vector<16x1xi1> to vector<16x32xi1>
      %47 = arith.select %46, %26, %44 : vector<16x32xi1>, vector<16x32xf32>
      %c0_26 = arith.constant 0 : index
      %c0_27 = arith.constant 0 : index
      %48 = vector.load %arg10[%c0_26, %c0_27] : memref<16x32xf32, #tpu.memory_space<vmem>>, vector<16x32xf32>
      tpu.vector_store %arg10[%c0_26, %c0_27], %47 {strides = array<i32>} : memref<16x32xf32, #tpu.memory_space<vmem>>, vector<16x32xf32>,
    } else {
    }
    %c0_i32_12 = arith.constant 0 : i32
    %33 = arith.cmpi eq, %arg1, %c0_i32_12 : i32
    %34 = arith.extui %33 : i1 to i32
    %c0_i32_13 = arith.constant 0 : i32
    %35 = arith.cmpi ne, %34, %c0_i32_13 : i32
    scf.if %35 {
      %c0_14 = arith.constant 0 : index
      %c0_15 = arith.constant 0 : index
      %36 = vector.load %arg10[%c0_14, %c0_15] : memref<16x32xf32, #tpu.memory_space<vmem>>, vector<16x32xf32>
      %c0_16 = arith.constant 0 : index
      %c0_17 = arith.constant 0 : index
      %37 = vector.load %arg5[%c0_16, %c0_17] : memref<16x32xf32, #tpu.memory_space<vmem>>, vector<16x32xf32>
      tpu.vector_store %arg5[%c0_16, %c0_17], %36 {strides = array<i32>} : memref<16x32xf32, #tpu.memory_space<vmem>>, vector<16x32xf32>,
      %c0_18 = arith.constant 0 : index
      %c0_19 = arith.constant 0 : index
      %38 = vector.load %arg9[%c0_18, %c0_19] : memref<16x1xi32, #tpu.memory_space<vmem>>, vector<16x1xi32>
      %c0_20 = arith.constant 0 : index
      %c0_21 = arith.constant 0 : index
      %39 = vector.load %arg6[%c0_20, %c0_21] : memref<16x1xi32, #tpu.memory_space<vmem>>, vector<16x1xi32>
      tpu.vector_store %arg6[%c0_20, %c0_21], %38 {strides = array<i32>} : memref<16x1xi32, #tpu.memory_space<vmem>>, vector<16x1xi32>,
      %c16_i32 = arith.constant 16 : i32
      %40 = arith.muli %arg0, %c16_i32 : i32
      %41 = tpu.iota {dimensions = array<i32: 0>} : vector<16x1xi32>
      %42 = vector.broadcast %40 : i32 to vector<16x1xi32>
      %43 = arith.addi %42, %41 : vector<16x1xi32>
      %c16_i32_22 = arith.constant 16 : i32
      %44 = vector.broadcast %c16_i32_22 : i32 to vector<16x1xi32>
      %45 = arith.cmpi slt, %43, %44 : vector<16x1xi32>
      %46 = arith.subf %36, %0 : vector<16x32xf32>
      %47 = arith.mulf %46, %46 : vector<16x32xf32>
      %cst_23 = arith.constant 0.000000e+00 : f32
      %48 = vector.shape_cast %45 : vector<16x1xi1> to vector<16x1xi1>
      %49 = vector.broadcast %48 : vector<16x1xi1> to vector<16x32xi1>
      %50 = vector.broadcast %cst_23 : f32 to vector<16x32xf32>
      %51 = arith.select %49, %47, %50 : vector<16x32xi1>, vector<16x32xf32>
      %cst_24 = arith.constant dense<0.000000e+00> : vector<32xf32>
      %52 = vector.multi_reduction <add>, %51, %cst_24 [0] : vector<16x32xf32> to vector<32xf32>
      %53 = vector.shape_cast %52 : vector<32xf32> to vector<1x32xf32>
      %c0_25 = arith.constant 0 : index
      %c0_26 = arith.constant 0 : index
      %c0_27 = arith.constant 0 : index
      %54 = vector.load %arg7[%c0_25, %c0_26, %c0_27] : memref<1x1x32xf32, #tpu.memory_space<vmem>>, vector<1x1x32xf32>
      %55 = vector.shape_cast %54 : vector<1x1x32xf32> to vector<1x32xf32>
      %56 = vector.shape_cast %53 : vector<1x32xf32> to vector<1x1x32xf32>
      tpu.vector_store %arg7[%c0_25, %c0_26, %c0_27], %56 {strides = array<i32>} : memref<1x1x32xf32, #tpu.memory_space<vmem>>, vector<1x1x32xf32>,
    } else {
    }
    return
  }
  func.func @transform_0(%arg0: i32, %arg1: i32) -> (i32, i32) {
    %c0_i32 = arith.constant 0 : i32
    %c0_i32_0 = arith.constant 0 : i32
    return %arg0, %c0_i32 : i32, i32
  }
  func.func @transform_1(%arg0: i32, %arg1: i32) -> (i32, i32) {
    %c0_i32 = arith.constant 0 : i32
    %c0_i32_0 = arith.constant 0 : i32
    return %arg1, %c0_i32 : i32, i32
  }
  func.func @transform_2(%arg0: i32, %arg1: i32) -> (i32, i32) {
    %c0_i32 = arith.constant 0 : i32
    %c0_i32_0 = arith.constant 0 : i32
    return %c0_i32, %arg1 : i32, i32
  }
  func.func @transform_3(%arg0: i32, %arg1: i32) -> (i32, i32) {
    %c0_i32 = arith.constant 0 : i32
    %c0_i32_0 = arith.constant 0 : i32
    return %arg0, %c0_i32 : i32, i32
  }
  func.func @transform_4(%arg0: i32, %arg1: i32) -> (i32, i32) {
    %c0_i32 = arith.constant 0 : i32
    %c0_i32_0 = arith.constant 0 : i32
    return %arg0, %c0_i32 : i32, i32
  }
  func.func @transform_5(%arg0: i32, %arg1: i32) -> (i32, i32, i32) {
    %c0_i32 = arith.constant 0 : i32
    %c0_i32_0 = arith.constant 0 : i32
    %c0_i32_1 = arith.constant 0 : i32
    return %arg0, %c0_i32, %c0_i32_0 : i32, i32, i32
  }
}

</mosaic_0001>

<llo_original>
// kernel: tpu_custom_call.1
$region0: #{tpu_custom_call.1}
  #allocation0 [shape = 'u32[]', space=smem, size = 0x4, offset = 0x4, fixed_abs, tag = 'smem constant byte address 0x4 - core index']
  #allocation1 [shape = 'u32[72,128]{1,0:T(1,128)}', space=vmem, size = 0x9000, scoped, tag = 'internal scratch']
  #allocation2 [shape = 'f32[16,1]{1,0:T(8,128)}', space=vmem, size = 0x2000, scoped, tag = 'scratch operand']
  #allocation3 [shape = 's32[16,1]{1,0:T(8,128)}', space=vmem, size = 0x2000, scoped, tag = 'scratch operand']
  #allocation4 [shape = 'f32[16,32]{1,0:T(8,128)}', space=vmem, size = 0x2000, scoped, tag = 'scratch operand']
  %s0 = inlined_call_operand.vmem [shape: f32[16,32], index: 0, kind: input, shape index: {}]
  %s1 = inlined_call_operand.vmem [shape: f32[128,32], index: 1, kind: input, shape index: {}]
  %s2 = inlined_call_operand.vmem [shape: f32[1,128], index: 2, kind: input, shape index: {}]
  %s3 = inlined_call_operand.hbm [shape: f32[16,32], index: 3, kind: output, shape index: {0}]
  %s4 = inlined_call_operand.vmem [shape: s32[16,1], index: 4, kind: output, shape index: {1}]
  %s5 = inlined_call_operand.hbm [shape: f32[1,1,32], index: 5, kind: output, shape index: {2}]
  %6 = xla_tuple %s3, %s4, %s5
  %s7 = sld [smem:[#allocation0]]
  $region50: #{tpu_custom_call.1} parent=0
    _
  %s9 = ssub.s32 1, %s7
  %s10 = scalar_select 0, %s9, %s7
  $region1: #{tpu_custom_call.1} parent=0
    #allocation5 [shape = 'u8[8192]{0}', space=vmem, size = 0x2000, scoped, tag = 'output window, operand 0, single buffered']
    #allocation6 [shape = 's32[1]{0}', space=sflag, size = 0x4, scoped, tag = 'scoped memory for tpu_custom_call.1']
    #allocation7 [shape = 'u8[512]{0}', space=vmem, size = 0x400, scoped, tag = 'output window, operand 2, single buffered']
    #allocation8 [shape = 's32[1]{0}', space=sflag, size = 0x4, scoped, tag = 'scoped memory for tpu_custom_call.1']
    %11 = vsyncpa [#allocation6], 0
    %12 = vsyncpa [#allocation8], 0
    // Predicated region
    $region2: #{tpu_custom_call.1} parent=1 // pred_check
      _
    $region3: #{tpu_custom_call.1} parent=1 // pred_check_branch
      %14 = sbr.rel (0) target = $region5
    $region4: #{tpu_custom_call.1} parent=1 // pred_region
      _
    $region5: #{tpu_custom_call.1} parent=1 // pred_fallthru
      _
    // Predicated region
    $region6: #{tpu_custom_call.1} parent=1 // pred_check
      _
    $region7: #{tpu_custom_call.1} parent=1 // pred_check_branch
      %16 = sbr.rel (0) target = $region9
    $region8: #{tpu_custom_call.1} parent=1 // pred_region
      _
    $region9: #{tpu_custom_call.1} parent=1 // pred_fallthru
      _
    // Predicated region
    $region10: #{tpu_custom_call.1} parent=1 // pred_check
      _
    $region11: #{tpu_custom_call.1} parent=1 // pred_check_branch
      %18 = sbr.rel (0) target = $region13
    $region12: #{tpu_custom_call.1} parent=1 // pred_region
      _
    $region13: #{tpu_custom_call.1} parent=1 // pred_fallthru
      _
    %v19 = vld [vmem:[%s0] sm:$0xff]
    %v20 = vld [vmem:[%s0 + $0x8] sm:$0xff]
    %v21 = vld [vmem:[%s1] sm:$0xff]
    %v22 = vld [vmem:[%s1 + $0x8] sm:$0xff]
    %v23 = vld [vmem:[%s1 + $0x10] sm:$0xff]
    %v24 = vld [vmem:[%s1 + $0x18] sm:$0xff]
    %v25 = vld [vmem:[%s1 + $0x20] sm:$0xff]
    %v26 = vld [vmem:[%s1 + $0x28] sm:$0xff]
    %v27 = vld [vmem:[%s1 + $0x30] sm:$0xff]
    %v28 = vld [vmem:[%s1 + $0x38] sm:$0xff]
    %v29 = vld [vmem:[%s1 + $0x40] sm:$0xff]
    %v30 = vld [vmem:[%s1 + $0x48] sm:$0xff]
    %v31 = vld [vmem:[%s1 + $0x50] sm:$0xff]
    %v32 = vld [vmem:[%s1 + $0x58] sm:$0xff]
    %v33 = vld [vmem:[%s1 + $0x60] sm:$0xff]
    %v34 = vld [vmem:[%s1 + $0x68] sm:$0xff]
    %v35 = vld [vmem:[%s1 + $0x70] sm:$0xff]
    %v36 = vld [vmem:[%s1 + $0x78] sm:$0xff]
    %v37 = vld [vmem:[%s2] sm:$0x1]
    %v38 = vpack.c.bf16 %v20, %v19
    %v39 = vpack.c.bf16 %v22, %v21
    %v40 = vpack.c.bf16 %v24, %v23
    %v41 = vpack.c.bf16 %v26, %v25
    %v42 = vpack.c.bf16 %v28, %v27
    %v43 = vpack.c.bf16 %v30, %v29
    %v44 = vpack.c.bf16 %v32, %v31
    %v45 = vpack.c.bf16 %v34, %v33
    %v46 = vpack.c.bf16 %v36, %v35
    %vm47 = vcmask 261120
    %v49 = vsel %vm47, %v38, 0
    %v52 = vsel %vm47, %v39, 0
    %v55 = vsel %vm47, %v40, 0
    %v58 = vsel %vm47, %v41, 0
    %v61 = vsel %vm47, %v42, 0
    %v64 = vsel %vm47, %v43, 0
    %v67 = vsel %vm47, %v44, 0
    %v70 = vsel %vm47, %v45, 0
    %v73 = vsel %vm47, %v46, 0
    %75 = vmatpush.bf16.xpose.msra.mxu0 %v73
    %76 = vmatpush.bf16.xpose.msra.mxu0 %v70
    %77 = vmatpush.bf16.xpose.msra.mxu0 %v67
    %78 = vmatpush.bf16.xpose.msra.mxu0 %v64
    %79 = vmatpush.bf16.xpose.msra.mxu0 %v61
    %80 = vmatpush.bf16.xpose.msra.mxu0 %v58
    %81 = vmatpush.bf16.xpose.msra.mxu0 %v55
    %82 = vmatpush.bf16.xpose.msra.mxu0 %v52
    %83 = vmatmul.bf16.gmra.mxu0 %v49
    %v84 = vpop.f32.mrf.mxu0
    %v85 = vadd.f32 0.0, %v84
    %v86 = vpop.f32.mrf.mxu0
    %v87 = vadd.f32 0.0, %v86
    %88 = vdwg.mxu0
    %v89 = vmul.f32 %v85, 2.0
    %v90 = vmul.f32 %v87, 2.0
    %v92 = vperm.slane %v37, 0
    %v94 = vsub.f32 %v92, %v89
    %v95 = vsub.f32 %v92, %v90
    %96 = vmin.xlane.f32.xlu0 %v94
    %v97 = vpop.xlane.xlu0 %96
    %98 = vmin.xlane.f32.xlu0 %v95
    %v99 = vpop.xlane.xlu0 %98
    %v100 = vlaneseq
    %v101 = vand.u32 %v100, 127
    %s102 = smul.u32 0, 128
    %v103 = vstv %s102
    %v104 = vadd.s32 %v101, %v103
    %vm105 = vcmp.eq.f32.partialorder %v94, %v97
    %vm106 = vcmp.eq.f32.partialorder %v95, %v99
    %v107 = vsel %vm105, %v104, 2147483647
    %v108 = vsel %vm106, %v104, 2147483647
    %v109 = vand.u32 %v107, 65535
    %v110 = vshra.s32 %v107, 16
    %v111 = vcvt.s32.f32 %v109
    %v112 = vcvt.s32.f32 %v110
    %113 = vmin.xlane.f32.xlu0 %v112
    %v114 = vpop.xlane.xlu0 %113
    %vm115 = vcmp.eq.f32.partialorder %v112, %v114
    %v116 = vsel %vm115, %v111, inf
    %117 = vmin.xlane.f32.xlu0 %v116
    %v118 = vpop.xlane.xlu0 %117
    %v119 = vcvt.f32.s32 %v118
    %v120 = vcvt.f32.s32 %v114
    %v121 = vshll.u32 %v120, 16
    %v122 = vadd.s32 %v121, %v119
    %v123 = vand.u32 %v108, 65535
    %v124 = vshra.s32 %v108, 16
    %v125 = vcvt.s32.f32 %v123
    %v126 = vcvt.s32.f32 %v124
    %127 = vmin.xlane.f32.xlu0 %v126
    %v128 = vpop.xlane.xlu0 %127
    %vm129 = vcmp.eq.f32.partialorder %v126, %v128
    %v130 = vsel %vm129, %v125, inf
    %131 = vmin.xlane.f32.xlu0 %v130
    %v132 = vpop.xlane.xlu0 %131
    %v133 = vcvt.f32.s32 %v132
    %v134 = vcvt.f32.s32 %v128
    %v135 = vshll.u32 %v134, 16
    %v136 = vadd.s32 %v135, %v133
    %vm137 = vcmp.eq.s32.totalorder %v104, %v122
    %vm138 = vcmp.eq.s32.totalorder %v104, %v136
    %v139 = vsel %vm137, 1, 0
    %v140 = vsel %vm138, 1, 0
    %v141 = vcvt.s32.f32 %v139
    %v142 = vcvt.s32.f32 %v140
    %143 = vmatpush.msra.mxu0 %v36
    %144 = vmatpush.msra.mxu0 %v35
    %145 = vmatpush.msra.mxu0 %v34
    %146 = vmatpush.msra.mxu0 %v33
    %147 = vmatpush.msra.mxu0 %v32
    %148 = vmatpush.msra.mxu0 %v31
    %149 = vmatpush.msra.mxu0 %v30
    %150 = vmatpush.msra.mxu0 %v29
    %151 = vmatpush.msra.mxu0 %v28
    %152 = vmatpush.msra.mxu0 %v27
    %153 = vmatpush.msra.mxu0 %v26
    %154 = vmatpush.msra.mxu0 %v25
    %155 = vmatpush.msra.mxu0 %v24
    %156 = vmatpush.msra.mxu0 %v23
    %157 = vmatpush.msra.mxu0 %v22
    %158 = vmatpush.msra.mxu0 %v21
    %159 = vmatmul.f32.gmra.mxu0 %v141
    %v160 = vpop.f32.mrf.mxu0
    %v161 = vadd.f32 0.0, %v160
    %162 = vmatmul.f32.gmra.mxu0 %v142
    %v163 = vpop.f32.mrf.mxu0
    %v164 = vadd.f32 0.0, %v163
    %165 = vdwg.mxu0
    %p166 = scmp.eq.s32.totalorder 0, 0
    // Predicated region
    $region14: #{tpu_custom_call.1} parent=1 // pred_check
      %p167 = pneg %p166
    $region15: #{tpu_custom_call.1} parent=1 // pred_check_branch
      %169 = sbr.rel (%p167) target = $region17
    $region16: #{tpu_custom_call.1} parent=1 // pred_region
      %vm170 = vcmask 7168
      %171 = vst.msk [vmem:[#allocation2] sm:$0xff] %vm170, %v97
      %172 = vst.msk [vmem:[#allocation2 + $0x8] sm:$0xff] %vm170, %v99
      %173 = vst.msk [vmem:[#allocation3] sm:$0xff] %vm170, %v122
      %174 = vst.msk [vmem:[#allocation3 + $0x8] sm:$0xff] %vm170, %v136
      %175 = vst.msk [vmem:[#allocation4] sm:$0xff] %vm47, %v161
      %176 = vst.msk [vmem:[#allocation4 + $0x8] sm:$0xff] %vm47, %v164
    $region17: #{tpu_custom_call.1} parent=1 // pred_fallthru
      _
    %p177 = scmp.gt.s32.totalorder 0, 0
    // Predicated region
    $region18: #{tpu_custom_call.1} parent=1 // pred_check
      %p178 = pneg %p177
    $region19: #{tpu_custom_call.1} parent=1 // pred_check_branch
      %180 = sbr.rel (%p178) target = $region21
    $region20: #{tpu_custom_call.1} parent=1 // pred_region
      %v181 = vld [vmem:[#allocation2] sm:$0xff]
      %v182 = vld [vmem:[#allocation2 + $0x8] sm:$0xff]
      %vm183 = vcmp.lt.f32.partialorder %v97, %v181
      %vm184 = vcmp.lt.f32.partialorder %v99, %v182
      %v185 = vsel %vm183, %v97, %v181
      %v186 = vsel %vm184, %v99, %v182
      %vm187 = vcmask 7168
      %188 = vst.msk [vmem:[#allocation2] sm:$0xff] %vm187, %v185
      %189 = vst.msk [vmem:[#allocation2 + $0x8] sm:$0xff] %vm187, %v186
      %v190 = vld [vmem:[#allocation3] sm:$0xff]
      %v191 = vld [vmem:[#allocation3 + $0x8] sm:$0xff]
      %v192 = vsel %vm183, %v122, %v190
      %v193 = vsel %vm184, %v136, %v191
      %194 = vst.msk [vmem:[#allocation3] sm:$0xff] %vm187, %v192
      %195 = vst.msk [vmem:[#allocation3 + $0x8] sm:$0xff] %vm187, %v193
      %v196 = vld [vmem:[#allocation4] sm:$0xff]
      %v197 = vld [vmem:[#allocation4 + $0x8] sm:$0xff]
      %v198 = vsel %vm183, 1, 0
      %v199 = vsel %vm184, 1, 0
      %200 = vset.pattern.permute.xlu0 0
      %201 = vperm.xlu0 %200, %v198
      %v202 = vpop.permute.xlu0 %201
      %203 = vset.pattern.permute.xlu0 0
      %204 = vperm.xlu0 %203, %v199
      %v205 = vpop.permute.xlu0 %204
      %vm206 = vcmp.eq.s32.totalorder %v202, 1
      %vm207 = vcmp.eq.s32.totalorder %v205, 1
      %v208 = vsel %vm206, %v161, %v196
      %v209 = vsel %vm207, %v164, %v197
      %210 = vst.msk [vmem:[#allocation4] sm:$0xff] %vm47, %v208
      %211 = vst.msk [vmem:[#allocation4 + $0x8] sm:$0xff] %vm47, %v209
    $region21: #{tpu_custom_call.1} parent=1 // pred_fallthru
      _
    // Predicated region
    $region22: #{tpu_custom_call.1} parent=1 // pred_check
      %p212 = pneg %p166
    $region23: #{tpu_custom_call.1} parent=1 // pred_check_branch
      %214 = sbr.rel (%p212) target = $region25
    $region24: #{tpu_custom_call.1} parent=1 // pred_region
      %v215 = vld [vmem:[#allocation4] sm:$0xff]
      %v216 = vld [vmem:[#allocation4 + $0x8] sm:$0xff]
      %217 = vst.msk [vmem:[#allocation5] sm:$0xff] %vm47, %v215
      %218 = vst.msk [vmem:[#allocation5 + $0x8] sm:$0xff] %vm47, %v216
      %v219 = vld [vmem:[#allocation3] sm:$0xff]
      %v220 = vld [vmem:[#allocation3 + $0x8] sm:$0xff]
      %vm221 = vcmask 7168
      %222 = vst.msk [vmem:[%s4] sm:$0xff] %vm221, %v219
      %223 = vst.msk [vmem:[%s4 + $0x8] sm:$0xff] %vm221, %v220
      %s224 = smul.u32 0, 16
      %v225 = vlaneseq
      %v226 = vshrl.u32 %v225, 7
      %v227 = vadd.s32 %v226, 8
      %v228 = vstv %s224
      %v229 = vadd.s32 %v228, %v226
      %v230 = vadd.s32 %v228, %v227
      %vm231 = vcmp.lt.s32.totalorder %v229, 16
      %vm232 = vcmp.lt.s32.totalorder %v230, 16
      %v233 = vsub.f32 %v215, %v19
      %v234 = vsub.f32 %v216, %v20
      %v235 = vmul.f32 %v233, %v233
      %v236 = vmul.f32 %v234, %v234
      %v237 = vsel %vm231, 1, 0
      %v238 = vsel %vm232, 1, 0
      %vm239 = vcmp.eq.s32.totalorder %v237, 1
      %vm240 = vcmp.eq.s32.totalorder %v238, 1
      %v241 = vsel %vm239, %v235, 0.0
      %v242 = vsel %vm240, %v236, 0.0
      %v243 = vsel %vm47, %v241, 0.0
      %v244 = vsel %vm47, %v242, 0.0
      %v245 = vadd.f32 %v243, %v244
      %v246 = vrot.slane %v245, 4
      %v247 = vadd.f32 %v245, %v246
      %v248 = vrot.slane %v247, 2
      %v249 = vadd.f32 %v247, %v248
      %v250 = vrot.slane %v249, 1
      %v251 = vadd.f32 %v249, %v250
      %vm252 = vcmask 253952
      %253 = vst.msk [vmem:[#allocation7] sm:$0x1] %vm252, %v251
    $region25: #{tpu_custom_call.1} parent=1 // pred_fallthru
      _
    // Predicated region
    $region26: #{tpu_custom_call.1} parent=1 // pred_check
      _
    $region27: #{tpu_custom_call.1} parent=1 // pred_check_branch
      %255 = sbr.rel (0) target = $region29
    $region28: #{tpu_custom_call.1} parent=1 // pred_region
      %257 = vsyncadd [#allocation6], 0
      %s258 = sshll.u32 [#allocation5], 4
      %s259 = int_to_ptr.vmem [resolvable:$true] %s258
      %s260 = sshll.u32 %s3, 4
      %s261 = int_to_ptr.hbm [resolvable:$true] %s260
      %266 = dma.vmem_to_hbm [thread:$0]  %s259, 256, %s261, [#allocation6], 128, 128, 8
    $region29: #{tpu_custom_call.1} parent=1 // pred_fallthru
      _
    // Predicated region
    $region30: #{tpu_custom_call.1} parent=1 // pred_check
      _
    $region31: #{tpu_custom_call.1} parent=1 // pred_check_branch
      %268 = sbr.rel (0) target = $region33
    $region32: #{tpu_custom_call.1} parent=1 // pred_region
      _
    $region33: #{tpu_custom_call.1} parent=1 // pred_fallthru
      _
    // Predicated region
    $region34: #{tpu_custom_call.1} parent=1 // pred_check
      _
    $region35: #{tpu_custom_call.1} parent=1 // pred_check_branch
      %270 = sbr.rel (0) target = $region37
    $region36: #{tpu_custom_call.1} parent=1 // pred_region
      %272 = vsyncadd [#allocation8], 0
      %s274 = sshll.u32 [#allocation7], 4
      %s275 = int_to_ptr.vmem [resolvable:$true] %s274
      %s276 = sshll.u32 %s5, 4
      %s277 = int_to_ptr.hbm [resolvable:$true] %s276
      %279 = dma.vmem_to_hbm [thread:$0]  %s275, 16, %s277, [#allocation8]
    $region37: #{tpu_custom_call.1} parent=1 // pred_fallthru
      _
    // Predicated region
    $region38: #{tpu_custom_call.1} parent=1 // pred_check
      _
    $region39: #{tpu_custom_call.1} parent=1 // pred_check_branch
      %281 = sbr.rel (0) target = $region41
    $region40: #{tpu_custom_call.1} parent=1 // pred_region
      %283 = dma.done [#allocation6], 256
    $region41: #{tpu_custom_call.1} parent=1 // pred_fallthru
      _
    // Predicated region
    $region42: #{tpu_custom_call.1} parent=1 // pred_check
      _
    $region43: #{tpu_custom_call.1} parent=1 // pred_check_branch
      %285 = sbr.rel (0) target = $region45
    $region44: #{tpu_custom_call.1} parent=1 // pred_region
      _
    $region45: #{tpu_custom_call.1} parent=1 // pred_fallthru
      _
    // Predicated region
    $region46: #{tpu_custom_call.1} parent=1 // pred_check
      _
    $region47: #{tpu_custom_call.1} parent=1 // pred_check_branch
      %287 = sbr.rel (0) target = $region49
    $region48: #{tpu_custom_call.1} parent=1 // pred_region
      %289 = dma.done [#allocation8], 16
    $region49: #{tpu_custom_call.1} parent=1 // pred_fallthru
      _
    %290 = vsyncpa [#allocation6], 1
    %291 = vsyncpa [#allocation8], 1

</llo_original>
